<compile_context>
chip_gen: v7x
topology: tpu7x:2x2x1
jax: 0.10.0
libtpu: 0.0.40
codegen_flags: <defaults>
</compile_context>

<pallas_src>
import functools

import jax
import jax.numpy as jnp
from jax.experimental import pallas as pl
from jax.experimental.pallas import tpu as pltpu


def _make_layernorm_kernel(h: int):
    """Row-tiled kernel over a (TR, H) block of the flattened (B*S, H) array."""

    inv_h = 1.0 / h
    inv_hm1 = 1.0 / (h - 1)

    def kernel(x_ref, o_ref):
        x = x_ref[...].astype(jnp.float32)

        # Fused per-row statistics: one pass over x producing sum and sum-of-squares.
        s = jnp.sum(x, axis=-1, keepdims=True)           # (TR, 1)
        ss = jnp.sum(x * x, axis=-1, keepdims=True)      # (TR, 1)
        mean = s * inv_h
        var = (ss - s * mean) * inv_hm1                  # unbiased (N-1) variance

        # Per-row reciprocal on the (TR, 1) column + broadcast multiply instead
        # of a full (TR, H) divide.  Exact reciprocal keeps the 1e-5 tolerance.
        inv = pl.reciprocal(var)
        o_ref[...] = ((x - mean) * inv).astype(o_ref.dtype)

    return kernel


@jax.jit
def layer_normalization(x):
    """out = (x - mean) / var over axis 2 (unbiased var), matching the PyTorch
    module exactly.  WARNING: divides by the variance (not std) and has no eps,
    per the reference; constant rows produce inf/NaN just like the original.
    """
    B, S, H = x.shape
    assert H >= 2, "unbiased variance (N-1 divisor) needs H >= 2"

    n_rows = B * S
    x2 = x.reshape(n_rows, H)

    itemsize = jnp.dtype(x.dtype).itemsize

    # --- Row-tile sizing -----------------------------------------------------
    # VMEM footprint per row: the lane dim is padded to a multiple of 128 in
    # on-chip layout, so budget with the padded width (HBM traffic stays H).
    lanes = ((H + 127) // 128) * 128
    vmem_row_bytes = lanes * itemsize     # per-row bytes of an in/out pipeline buffer
    vmem_row_f32 = lanes * 4              # per-row bytes of an in-kernel f32 temp

    # ~4 MiB per input block (dtype-aware: bf16 inputs get ~2x the rows of f32
    # for the same I/O footprint), rounded to a multiple of 8 rows.
    block_budget = 4 << 20
    tr_budget = max(8, (block_budget // vmem_row_bytes) // 8 * 8)
    # If the whole row range fits in one block, use the full extent (legal for
    # any n_rows, including n_rows < 8); otherwise a multiple-of-8 tile with a
    # Pallas-handled partial last block.
    TR = n_rows if tr_budget >= n_rows else tr_budget
    # TODO(synk): add a column-blocked / streaming-stats path for very wide H
    # where even an 8-row block exceeds the VMEM budget.

    grid = (pl.cdiv(n_rows, TR),)

    # Explicit scoped-VMEM limit: double-buffered in+out pipeline buffers plus
    # headroom for the f32 intermediates, clamped to fit every generation
    # (v5e/v6e 128 MiB physical, v7x 64 MiB physical per TC).
    vmem_need = TR * (4 * vmem_row_bytes + 3 * vmem_row_f32) + (2 << 20)
    vmem_limit = int(min(max(vmem_need, 24 << 20), 48 << 20))

    cost = pl.CostEstimate(
        flops=6 * n_rows * H,
        transcendentals=0,
        bytes_accessed=2 * n_rows * H * itemsize,
    )

    out2 = pl.pallas_call(
        _make_layernorm_kernel(H),
        out_shape=jax.ShapeDtypeStruct((n_rows, H), x.dtype),
        grid_spec=pl.GridSpec(
            grid=grid,
            in_specs=[pl.BlockSpec((TR, H), lambda r: (r, 0))],
            out_specs=pl.BlockSpec((TR, H), lambda r: (r, 0)),
        ),
        compiler_params=pltpu.CompilerParams(
            dimension_semantics=("parallel",),
            vmem_limit_bytes=vmem_limit,
        ),
        cost_estimate=cost,
    )(x2)

    return out2.reshape(B, S, H)


def layer_normalization_ref(x):
    # Pure-JAX reference mirroring the PyTorch code for verification.
    mean = jnp.mean(x, axis=2, keepdims=True)
    var = jnp.var(x, axis=2, keepdims=True, ddof=1)  # unbiased, like torch.var
    return (x - mean) / var


if __name__ == "__main__":
    # Small shape consistent with the module's forward: (batch, seq, hidden)
    B, S, H = 2, 8, 32
    key = jax.random.PRNGKey(0)
    x = jax.random.normal(key, (B, S, H), dtype=jnp.float32)

    out = layer_normalization(x)
    out = jax.block_until_ready(out)

    ref = layer_normalization_ref(x)
    assert out.shape == (B, S, H)
    assert jnp.allclose(out, ref, atol=1e-5, rtol=1e-5), "mismatch vs reference"

    print("KERNEL_OK")
</pallas_src>

<mosaic_0001>
module attributes {stable_mosaic.version = 11 : i64} {
  func.func @kernel(%arg0: i32, %arg1: memref<16x32xf32, #tpu.memory_space<vmem>>, %arg2: memref<16x32xf32, #tpu.memory_space<vmem>>) attributes {dimension_semantics = [#tpu.dimension_semantics<parallel>], iteration_bounds = array<i64: 1>, scalar_prefetch = 0 : i64, scratch_operands = 0 : i64, tpu.core_type = #tpu.core_type<tc>, window_params = [{transform_indices = @transform_0, window_bounds = array<i64: 16, 32>}, {transform_indices = @transform_1, window_bounds = array<i64: 16, 32>}]} {
    %c0 = arith.constant 0 : index
    %c0_0 = arith.constant 0 : index
    %0 = vector.load %arg1[%c0, %c0_0] : memref<16x32xf32, #tpu.memory_space<vmem>>, vector<16x32xf32>
    %cst = arith.constant dense<0.000000e+00> : vector<16xf32>
    %1 = vector.multi_reduction <add>, %0, %cst [1] : vector<16x32xf32> to vector<16xf32>
    %2 = vector.shape_cast %1 : vector<16xf32> to vector<16x1xf32>
    %3 = arith.mulf %0, %0 : vector<16x32xf32>
    %cst_1 = arith.constant dense<0.000000e+00> : vector<16xf32>
    %4 = vector.multi_reduction <add>, %3, %cst_1 [1] : vector<16x32xf32> to vector<16xf32>
    %5 = vector.shape_cast %4 : vector<16xf32> to vector<16x1xf32>
    %cst_2 = arith.constant 3.125000e-02 : f32
    %6 = vector.broadcast %cst_2 : f32 to vector<16x1xf32>
    %7 = arith.mulf %2, %6 : vector<16x1xf32>
    %8 = arith.mulf %2, %7 : vector<16x1xf32>
    %9 = arith.subf %5, %8 : vector<16x1xf32>
    %cst_3 = arith.constant 0.0322580636 : f32
    %10 = vector.broadcast %cst_3 : f32 to vector<16x1xf32>
    %11 = arith.mulf %9, %10 : vector<16x1xf32>
    %12 = tpu.reciprocal %11 : vector<16x1xf32> -> vector<16x1xf32>
    %13 = vector.broadcast %7 : vector<16x1xf32> to vector<16x32xf32>
    %14 = arith.subf %0, %13 : vector<16x32xf32>
    %15 = vector.broadcast %12 : vector<16x1xf32> to vector<16x32xf32>
    %16 = arith.mulf %14, %15 : vector<16x32xf32>
    %c0_4 = arith.constant 0 : index
    %c0_5 = arith.constant 0 : index
    %17 = vector.load %arg2[%c0_4, %c0_5] : memref<16x32xf32, #tpu.memory_space<vmem>>, vector<16x32xf32>
    tpu.vector_store %arg2[%c0_4, %c0_5], %16 {strides = array<i32>} : memref<16x32xf32, #tpu.memory_space<vmem>>, vector<16x32xf32>,
    return
  }
  func.func @transform_0(%arg0: i32) -> (i32, i32) {
    %c0_i32 = arith.constant 0 : i32
    %c0_i32_0 = arith.constant 0 : i32
    return %arg0, %c0_i32 : i32, i32
  }
  func.func @transform_1(%arg0: i32) -> (i32, i32) {
    %c0_i32 = arith.constant 0 : i32
    %c0_i32_0 = arith.constant 0 : i32
    return %arg0, %c0_i32 : i32, i32
  }
}

</mosaic_0001>

<llo_original>
// kernel: layer_normalization.1
$region0: #{layer_normalization.1}
  #allocation0 [shape = 'u32[]', space=smem, size = 0x4, offset = 0x4, fixed_abs, tag = 'smem constant byte address 0x4 - core index']
  #allocation1 [shape = 'u32[144,128]{1,0:T(1,128)}', space=vmem, size = 0x12000, scoped, tag = 'internal scratch']
  %s0 = inlined_call_operand.hbm [shape: f32[16,32], index: 0, kind: input, shape index: {}]
  %s1 = inlined_call_operand.hbm [shape: f32[16,32], index: 1, kind: output, shape index: {}]
  %s2 = sld [smem:[#allocation0]]
  $region18: #{layer_normalization.1} parent=0
    _
  %s4 = ssub.s32 1, %s2
  %s5 = scalar_select 0, %s4, %s2
  $region1: #{layer_normalization.1} parent=0
    #allocation2 [shape = 'u8[8192]{0}', space=vmem, size = 0x2000, scoped, tag = 'input window, operand 0, single buffered']
    #allocation3 [shape = 's32[1]{0}', space=sflag, size = 0x4, scoped, tag = 'scoped memory for layer_normalization.1']
    #allocation4 [shape = 's32[1]{0}', space=sflag, size = 0x4, scoped, tag = 'scoped memory for layer_normalization.1']
    #allocation5 [shape = 'u8[8192]{0}', space=vmem, size = 0x2000, scoped, tag = 'output window, operand 0, single buffered']
    %6 = vsyncpa [#allocation3], 0
    %7 = vsyncpa [#allocation4], 0
    // Predicated region
    $region2: #{layer_normalization.1} parent=1 // pred_check
      _
    $region3: #{layer_normalization.1} parent=1 // pred_check_branch
      %9 = sbr.rel (0) target = $region5
    $region4: #{layer_normalization.1} parent=1 // pred_region
      %s11 = ssub.s32 256, 256
      %12 = vsyncadd [#allocation3], %s11
      %s13 = sshll.u32 [#allocation2], 4
      %s14 = int_to_ptr.vmem [resolvable:$true] %s13
      %19 = dma.hbm_to_vmem [thread:$0]  %s0, 256, %s14, [#allocation3], 128, 128, 8
    $region5: #{layer_normalization.1} parent=1 // pred_fallthru
      _
    // Predicated region
    $region6: #{layer_normalization.1} parent=1 // pred_check
      _
    $region7: #{layer_normalization.1} parent=1 // pred_check_branch
      %21 = sbr.rel (0) target = $region9
    $region8: #{layer_normalization.1} parent=1 // pred_region
      %22 = dma.done [#allocation3], 256
    $region9: #{layer_normalization.1} parent=1 // pred_fallthru
      _
    %v23 = vld [vmem:[#allocation2] sm:$0xff]
    %v24 = vld [vmem:[#allocation2 + $0x8] sm:$0xff]
    %vm25 = vcmask 261120
    %v26 = vsel %vm25, %v23, 0.0
    %27 = vadd.xlane.f32.xlu0 %v26
    %v28 = vpop.xlane.xlu0 %27
    %v29 = vsel %vm25, %v24, 0.0
    %30 = vadd.xlane.f32.xlu0 %v29
    %v31 = vpop.xlane.xlu0 %30
    %v32 = vmul.f32 %v23, %v23
    %v33 = vmul.f32 %v24, %v24
    %v34 = vsel %vm25, %v32, 0.0
    %35 = vadd.xlane.f32.xlu0 %v34
    %v36 = vpop.xlane.xlu0 %35
    %v37 = vsel %vm25, %v33, 0.0
    %38 = vadd.xlane.f32.xlu0 %v37
    %v39 = vpop.xlane.xlu0 %38
    %v40 = vmul.f32 %v28, 0.03125
    %v41 = vmul.f32 %v31, 0.03125
    %v42 = vmul.f32 %v28, %v40
    %v43 = vmul.f32 %v31, %v41
    %v44 = vsub.f32 %v36, %v42
    %v45 = vsub.f32 %v39, %v43
    %v46 = vmul.f32 %v44, 0.032258064
    %v47 = vmul.f32 %v45, 0.032258064
    %v48 = vrcp.pop %v46
    %v49 = vrcp.pop %v47
    %v50 = vsub.f32 %v23, %v40
    %v51 = vsub.f32 %v24, %v41
    %v52 = vmul.f32 %v50, %v48
    %v53 = vmul.f32 %v51, %v49
    %54 = vst.msk [vmem:[#allocation5] sm:$0xff] %vm25, %v52
    %55 = vst.msk [vmem:[#allocation5 + $0x8] sm:$0xff] %vm25, %v53
    // Predicated region
    $region10: #{layer_normalization.1} parent=1 // pred_check
      _
    $region11: #{layer_normalization.1} parent=1 // pred_check_branch
      %57 = sbr.rel (0) target = $region13
    $region12: #{layer_normalization.1} parent=1 // pred_region
      %s59 = ssub.s32 256, 256
      %60 = vsyncadd [#allocation4], %s59
      %s61 = sshll.u32 [#allocation5], 4
      %s62 = int_to_ptr.vmem [resolvable:$true] %s61
      %67 = dma.vmem_to_hbm [thread:$0]  %s62, 256, %s1, [#allocation4], 128, 128, 8
    $region13: #{layer_normalization.1} parent=1 // pred_fallthru
      _
    // Predicated region
    $region14: #{layer_normalization.1} parent=1 // pred_check
      _
    $region15: #{layer_normalization.1} parent=1 // pred_check_branch
      %69 = sbr.rel (0) target = $region17
    $region16: #{layer_normalization.1} parent=1 // pred_region
      %70 = dma.done [#allocation4], 256
    $region17: #{layer_normalization.1} parent=1 // pred_fallthru
      _
    %71 = vsyncpa [#allocation3], 1
    %72 = vsyncpa [#allocation4], 1

</llo_original>
